<compile_context>
chip_gen: v7x
topology: tpu7x:2x2x1
jax: 0.10.0
libtpu: 0.0.40
codegen_flags: <defaults>
</compile_context>

<pallas_src>
import functools

import jax
import jax.numpy as jnp
from jax.experimental import pallas as pl
from jax.experimental.pallas import tpu as pltpu

_LANE = 128
_SUBLANE = 8


def _round_up(n, m):
    return (n + m - 1) // m * m


def _cdiv(a, b):
    return -(-a // b)


def _device_kind():
    try:
        return jax.devices()[0].device_kind.lower()
    except Exception:  # pragma: no cover - defensive
        return ""


def _default_elem_dtype():
    # v6e / v7x have bf16 VPU + EUP -> run bias-add & tanh in bf16 (halves the
    # elementwise work and skips a separate f32->bf16 pack before the next
    # MXU op).  v5e and older have no bf16 VPU/EUP, so keep f32 there.
    kind = _device_kind()
    if any(tag in kind for tag in ("v2", "v3", "v4", "v5")):
        return jnp.float32
    return jnp.bfloat16


def _physical_vmem_bytes():
    # v7x has 64 MiB VMEM per TensorCore; v5e/v6e have 128 MiB.
    kind = _device_kind()
    return (64 << 20) if "7" in kind else (128 << 20)


# ---------------------------------------------------------------------------
# Kernel
# ---------------------------------------------------------------------------
def _decoder_kernel(x_ref, w1_ref, b1_ref, w2_ref, b2_ref, whl_ref, bhl_ref,
                    out_ref, *, elem_dtype):
    # x tile: (TILE_B, input_dim), f32 or bf16; MXU operands are bf16 and the
    # cast below is a no-op if the producer already hands us bf16.
    x = x_ref[...].astype(jnp.bfloat16)

    # linear1 + tanh.  MXU accumulates in f32; bias-add + tanh run in
    # elem_dtype (bf16 on v6e/v7x, f32 on v5e).
    a1 = jnp.dot(x, w1_ref[...], preferred_element_type=jnp.float32)
    h1 = jnp.tanh(a1.astype(elem_dtype) + b1_ref[...].astype(elem_dtype))

    # linear2 + tanh.  Output columns are lane-padded to a multiple of 128;
    # padded columns carry zero weight & bias -> tanh(0) = 0 exactly.
    a2 = jnp.dot(h1.astype(jnp.bfloat16), w2_ref[...],
                 preferred_element_type=jnp.float32)
    h2 = jnp.tanh(a2.astype(elem_dtype) + b2_ref[...].astype(elem_dtype))

    # Fused linearH/linearL head: columns interleaved [H0,L0,H1,L1,...] and
    # lane-padded.  Padded whl rows are zero, so the zero-padded h2 columns
    # contribute nothing; stores are full-lane (unmasked) vst's.
    out_ref[...] = (
        jnp.dot(h2.astype(jnp.bfloat16), whl_ref[...],
                preferred_element_type=jnp.float32)
        + bhl_ref[...]
    )


# ---------------------------------------------------------------------------
# Host-side parameter preparation
# ---------------------------------------------------------------------------
def prepare_params(params):
    """Fuse the H/L heads (interleaved columns), lane-pad the 2*seq_len axis
    to a multiple of 128 and pre-cast matmul weights to bf16.  Done once."""
    w1, b1, w2, b2, wh, bh, wl, bl = params
    seq_len = wh.shape[1]
    two_seq = 2 * seq_len
    ts_pad = _round_up(two_seq, _LANE)
    pad = ts_pad - two_seq

    # Column-interleave: fused[:, 2i] = wh[:, i], fused[:, 2i+1] = wl[:, i].
    whl = jnp.stack([wh, wl], axis=-1).reshape(two_seq, two_seq)
    bhl = jnp.stack([bh, bl], axis=-1).reshape(1, two_seq)

    # Zero lane-padding: padded w2/b2 columns -> tanh(0)=0 in h2; padded whl
    # rows are zero so they add nothing; padded whl/bhl columns are sliced off
    # in the wrapper.
    w2 = jnp.pad(w2, ((0, 0), (0, pad)))
    b2 = jnp.pad(b2, ((0, 0), (0, pad)))
    whl = jnp.pad(whl, ((0, pad), (0, pad)))
    bhl = jnp.pad(bhl, ((0, 0), (0, pad)))

    return (w1.astype(jnp.bfloat16), b1,
            w2.astype(jnp.bfloat16), b2,
            whl.astype(jnp.bfloat16), bhl)


def _resident_spec(shape, single_buffer):
    """BlockSpec for a block that is identical at every grid step."""
    index_map = lambda i: (0, 0)
    if single_buffer:
        # Constant blocks don't need double-buffering; a single VMEM buffer
        # halves their footprint (matters once whl gets large on v7x).
        return pl.BlockSpec(shape, index_map, pipeline_mode=pl.Buffered(1))
    return pl.BlockSpec(shape, index_map)


# ---------------------------------------------------------------------------
# Wrapper
# ---------------------------------------------------------------------------
def decoder_forward(x, kernel_params, *, seq_len, elem_dtype=None,
                    max_tile_b=4096, min_grid_steps=2):
    """x: (B, input_dim) float32 (or bfloat16).  Returns (B, seq_len, 2) f32."""
    w1, b1, w2, b2, whl, bhl = kernel_params
    B, input_dim = x.shape
    hidden = w1.shape[1]
    ts_pad = whl.shape[1]          # 2*seq_len lane-padded to a multiple of 128
    two_seq = 2 * seq_len

    if elem_dtype is None:
        elem_dtype = _default_elem_dtype()

    # ---- batch tile selection --------------------------------------------
    # Fewer, fatter grid steps amortize the ~0.35us per-step cost; at least
    # `min_grid_steps` steps keeps both TensorCores busy on v7x (the batch
    # axis is "parallel").  tile_b is chosen to minimize tail padding and is
    # kept a multiple of 8 (sublane alignment).
    steps = _cdiv(B, max_tile_b)
    if B >= 2 * _SUBLANE:
        steps = max(steps, min_grid_steps)
    tile_b = _round_up(_cdiv(B, steps), _SUBLANE)

    # ---- VMEM budget -------------------------------------------------------
    x_itemsize = jnp.dtype(x.dtype).itemsize
    weight_bytes = sum(int(a.size) * jnp.dtype(a.dtype).itemsize
                       for a in (w1, b1, w2, b2, whl, bhl))
    single_buffer_weights = weight_bytes > (8 << 20)
    weight_bufs = 1 if single_buffer_weights else 2

    def vmem_estimate(tb):
        x_tile = tb * input_dim * x_itemsize
        out_tile = tb * ts_pad * 4
        interm = tb * (hidden + ts_pad) * (4 + 2)   # f32 acc + bf16 staging
        return 2 * x_tile + 2 * out_tile + weight_bufs * weight_bytes + interm

    budget = _physical_vmem_bytes() - (12 << 20)
    while tile_b > _SUBLANE and vmem_estimate(tile_b) > budget:
        tile_b = max(_SUBLANE, _round_up(tile_b // 2, _SUBLANE))

    vmem_limit = int(min(_physical_vmem_bytes() - (2 << 20),
                         max(16 << 20, vmem_estimate(tile_b) + (8 << 20))))

    b_pad = _round_up(B, tile_b)
    if b_pad != B:
        x = jnp.pad(x, ((0, b_pad - B), (0, 0)))
    grid = (b_pad // tile_b,)

    out = pl.pallas_call(
        functools.partial(_decoder_kernel, elem_dtype=elem_dtype),
        grid=grid,
        in_specs=[
            # batch-tiled activation input
            pl.BlockSpec((tile_b, input_dim), lambda i: (i, 0)),
            # weights / biases: resident in VMEM across all grid steps
            _resident_spec((input_dim, hidden), single_buffer_weights),
            _resident_spec((1, hidden), single_buffer_weights),
            _resident_spec((hidden, ts_pad), single_buffer_weights),
            _resident_spec((1, ts_pad), single_buffer_weights),
            _resident_spec((ts_pad, ts_pad), single_buffer_weights),
            _resident_spec((1, ts_pad), single_buffer_weights),
        ],
        out_specs=pl.BlockSpec((tile_b, ts_pad), lambda i: (i, 0)),
        out_shape=jax.ShapeDtypeStruct((b_pad, ts_pad), jnp.float32),
        compiler_params=pltpu.CompilerParams(
            dimension_semantics=("parallel",),
            vmem_limit_bytes=vmem_limit,
        ),
    )(x, w1, b1, w2, b2, whl, bhl)

    # Drop lane padding and padded batch rows; interleaved columns
    # [H0,L0,H1,L1,...] -> (B, seq_len, 2) is a free reshape.
    return out[:B, :two_seq].reshape(B, seq_len, 2)


# ---------------------------------------------------------------------------
# Params / references
# ---------------------------------------------------------------------------
def init_params(key, seq_len, input_dim):
    """PyTorch-Linear-style init: U(-1/sqrt(fan_in), 1/sqrt(fan_in)).
    Weights are returned already transposed to (in_features, out_features)."""
    hidden = 2 ** 8

    def linear(key, fan_in, fan_out):
        kw, kb = jax.random.split(key)
        bound = 1.0 / jnp.sqrt(fan_in)
        w = jax.random.uniform(kw, (fan_in, fan_out), jnp.float32, -bound, bound)
        b = jax.random.uniform(kb, (1, fan_out), jnp.float32, -bound, bound)
        return w, b

    k1, k2, kh, kl = jax.random.split(key, 4)
    w1, b1 = linear(k1, input_dim, hidden)        # linear1: input_dim -> 256
    w2, b2 = linear(k2, hidden, 2 * seq_len)      # linear2: 256 -> 2*seq_len
    wh, bh = linear(kh, 2 * seq_len, seq_len)     # linearH: 2*seq_len -> seq_len
    wl, bl = linear(kl, 2 * seq_len, seq_len)     # linearL: 2*seq_len -> seq_len
    return (w1, b1, w2, b2, wh, bh, wl, bl)


def reference_forward_f32(x, params):
    """Pure-JAX f32 reference of the PyTorch forward."""
    w1, b1, w2, b2, wh, bh, wl, bl = params
    h = jnp.tanh(x @ w1 + b1)
    h = jnp.tanh(h @ w2 + b2)
    hx = h @ wh + bh
    lx = h @ wl + bl
    return jnp.stack([hx, lx], axis=2)


def reference_forward_recipe(x, params, elem_dtype):
    """Pure-JAX reference using the same bf16-operand / f32-accumulate /
    elem_dtype-elementwise recipe as the kernel."""
    w1, b1, w2, b2, wh, bh, wl, bl = params
    bf = jnp.bfloat16
    a1 = jnp.dot(x.astype(bf), w1.astype(bf), preferred_element_type=jnp.float32)
    h1 = jnp.tanh(a1.astype(elem_dtype) + b1.astype(elem_dtype))
    a2 = jnp.dot(h1.astype(bf), w2.astype(bf), preferred_element_type=jnp.float32)
    h2 = jnp.tanh(a2.astype(elem_dtype) + b2.astype(elem_dtype))
    hx = jnp.dot(h2.astype(bf), wh.astype(bf), preferred_element_type=jnp.float32) + bh
    lx = jnp.dot(h2.astype(bf), wl.astype(bf), preferred_element_type=jnp.float32) + bl
    return jnp.stack([hx, lx], axis=2)


# ---------------------------------------------------------------------------
# Self-test
# ---------------------------------------------------------------------------
if __name__ == "__main__":
    seq_len = 8
    input_dim = 32
    batch = 8

    key = jax.random.PRNGKey(0)
    kx, kp = jax.random.split(key)
    x = jax.random.normal(kx, (batch, input_dim), jnp.float32)
    params = init_params(kp, seq_len, input_dim)
    kparams = prepare_params(params)

    fwd = jax.jit(functools.partial(decoder_forward, seq_len=seq_len))
    out = jax.block_until_ready(fwd(x, kparams))

    assert out.shape == (batch, seq_len, 2), out.shape

    # Check vs. a reference that uses the same dtype recipe as the kernel.
    elem_dtype = _default_elem_dtype()
    ref_recipe = reference_forward_recipe(x, params, elem_dtype)
    assert jnp.allclose(out, ref_recipe, atol=2e-2, rtol=2e-2), \
        "mismatch vs same-recipe reference"

    # Loose check vs. the exact f32 (PyTorch-equivalent) reference.
    ref_f32 = reference_forward_f32(x, params)
    assert jnp.allclose(out, ref_f32, atol=6e-2, rtol=6e-2), \
        "mismatch vs f32 reference"

    print("KERNEL_OK")
</pallas_src>

<mosaic_0001>
module attributes {stable_mosaic.version = 11 : i64} {
  func.func @_decoder_kernel(%arg0: i32, %arg1: memref<8x32xf32, #tpu.memory_space<vmem>>, %arg2: memref<32x256xbf16, #tpu.memory_space<vmem>>, %arg3: memref<1x256xf32, #tpu.memory_space<vmem>>, %arg4: memref<256x128xbf16, #tpu.memory_space<vmem>>, %arg5: memref<1x128xf32, #tpu.memory_space<vmem>>, %arg6: memref<128x128xbf16, #tpu.memory_space<vmem>>, %arg7: memref<1x128xf32, #tpu.memory_space<vmem>>, %arg8: memref<8x128xf32, #tpu.memory_space<vmem>>) attributes {dimension_semantics = [#tpu.dimension_semantics<parallel>], iteration_bounds = array<i64: 1>, scalar_prefetch = 0 : i64, scratch_operands = 0 : i64, tpu.core_type = #tpu.core_type<tc>, window_params = [{transform_indices = @transform_0, window_bounds = array<i64: 8, 32>}, {pipeline_mode = #tpu.pipeline_mode<synchronous>, transform_indices = @transform_1, window_bounds = array<i64: 32, 256>}, {pipeline_mode = #tpu.pipeline_mode<synchronous>, transform_indices = @transform_2, window_bounds = array<i64: 1, 256>}, {pipeline_mode = #tpu.pipeline_mode<synchronous>, transform_indices = @transform_3, window_bounds = array<i64: 256, 128>}, {pipeline_mode = #tpu.pipeline_mode<synchronous>, transform_indices = @transform_4, window_bounds = array<i64: 1, 128>}, {pipeline_mode = #tpu.pipeline_mode<synchronous>, transform_indices = @transform_5, window_bounds = array<i64: 128, 128>}, {pipeline_mode = #tpu.pipeline_mode<synchronous>, transform_indices = @transform_6, window_bounds = array<i64: 1, 128>}, {transform_indices = @transform_7, window_bounds = array<i64: 8, 128>}]} {
    %c0 = arith.constant 0 : index
    %c0_0 = arith.constant 0 : index
    %0 = vector.load %arg1[%c0, %c0_0] : memref<8x32xf32, #tpu.memory_space<vmem>>, vector<8x32xf32>
    %1 = arith.truncf %0 : vector<8x32xf32> to vector<8x32xbf16>
    %c0_1 = arith.constant 0 : index
    %c0_2 = arith.constant 0 : index
    %2 = vector.load %arg2[%c0_1, %c0_2] : memref<32x256xbf16, #tpu.memory_space<vmem>>, vector<32x256xbf16>
    %cst = arith.constant dense<0.000000e+00> : vector<8x256xf32>
    %3 = tpu.matmul %1, %2, %cst {dimension_numbers = #tpu.dot_dimension_numbers<[1], [0], [0], [1], [0, 0, 1, 1], [], []>} : vector<8x32xbf16>, vector<32x256xbf16>, vector<8x256xf32> -> vector<8x256xf32>
    %4 = arith.truncf %3 : vector<8x256xf32> to vector<8x256xbf16>
    %c0_3 = arith.constant 0 : index
    %c0_4 = arith.constant 0 : index
    %5 = vector.load %arg3[%c0_3, %c0_4] : memref<1x256xf32, #tpu.memory_space<vmem>>, vector<1x256xf32>
    %6 = arith.truncf %5 : vector<1x256xf32> to vector<1x256xbf16>
    %7 = vector.broadcast %6 : vector<1x256xbf16> to vector<8x256xbf16>
    %8 = arith.addf %4, %7 : vector<8x256xbf16>
    %9 = math.tanh %8 : vector<8x256xbf16>
    %c0_5 = arith.constant 0 : index
    %c0_6 = arith.constant 0 : index
    %10 = vector.load %arg4[%c0_5, %c0_6] : memref<256x128xbf16, #tpu.memory_space<vmem>>, vector<256x128xbf16>
    %cst_7 = arith.constant dense<0.000000e+00> : vector<8x128xf32>
    %11 = tpu.matmul %9, %10, %cst_7 {dimension_numbers = #tpu.dot_dimension_numbers<[1], [0], [0], [1], [0, 0, 1, 1], [], []>} : vector<8x256xbf16>, vector<256x128xbf16>, vector<8x128xf32> -> vector<8x128xf32>
    %12 = arith.truncf %11 : vector<8x128xf32> to vector<8x128xbf16>
    %c0_8 = arith.constant 0 : index
    %c0_9 = arith.constant 0 : index
    %13 = vector.load %arg5[%c0_8, %c0_9] : memref<1x128xf32, #tpu.memory_space<vmem>>, vector<1x128xf32>
    %14 = arith.truncf %13 : vector<1x128xf32> to vector<1x128xbf16>
    %15 = vector.broadcast %14 : vector<1x128xbf16> to vector<8x128xbf16>
    %16 = arith.addf %12, %15 : vector<8x128xbf16>
    %17 = math.tanh %16 : vector<8x128xbf16>
    %c0_10 = arith.constant 0 : index
    %c0_11 = arith.constant 0 : index
    %18 = vector.load %arg6[%c0_10, %c0_11] : memref<128x128xbf16, #tpu.memory_space<vmem>>, vector<128x128xbf16>
    %cst_12 = arith.constant dense<0.000000e+00> : vector<8x128xf32>
    %19 = tpu.matmul %17, %18, %cst_12 {dimension_numbers = #tpu.dot_dimension_numbers<[1], [0], [0], [1], [0, 0, 1, 1], [], []>} : vector<8x128xbf16>, vector<128x128xbf16>, vector<8x128xf32> -> vector<8x128xf32>
    %c0_13 = arith.constant 0 : index
    %c0_14 = arith.constant 0 : index
    %20 = vector.load %arg7[%c0_13, %c0_14] : memref<1x128xf32, #tpu.memory_space<vmem>>, vector<1x128xf32>
    %21 = vector.broadcast %20 : vector<1x128xf32> to vector<8x128xf32>
    %22 = arith.addf %19, %21 : vector<8x128xf32>
    %c0_15 = arith.constant 0 : index
    %c0_16 = arith.constant 0 : index
    %23 = vector.load %arg8[%c0_15, %c0_16] : memref<8x128xf32, #tpu.memory_space<vmem>>, vector<8x128xf32>
    tpu.vector_store %arg8[%c0_15, %c0_16], %22 {strides = array<i32>} : memref<8x128xf32, #tpu.memory_space<vmem>>, vector<8x128xf32>,
    return
  }
  func.func @transform_0(%arg0: i32) -> (i32, i32) {
    %c0_i32 = arith.constant 0 : i32
    %c0_i32_0 = arith.constant 0 : i32
    return %arg0, %c0_i32 : i32, i32
  }
  func.func @transform_1(%arg0: i32) -> (i32, i32) {
    %c0_i32 = arith.constant 0 : i32
    %c0_i32_0 = arith.constant 0 : i32
    %c0_i32_1 = arith.constant 0 : i32
    return %c0_i32, %c0_i32_0 : i32, i32
  }
  func.func @transform_2(%arg0: i32) -> (i32, i32) {
    %c0_i32 = arith.constant 0 : i32
    %c0_i32_0 = arith.constant 0 : i32
    %c0_i32_1 = arith.constant 0 : i32
    return %c0_i32, %c0_i32_0 : i32, i32
  }
  func.func @transform_3(%arg0: i32) -> (i32, i32) {
    %c0_i32 = arith.constant 0 : i32
    %c0_i32_0 = arith.constant 0 : i32
    %c0_i32_1 = arith.constant 0 : i32
    return %c0_i32, %c0_i32_0 : i32, i32
  }
  func.func @transform_4(%arg0: i32) -> (i32, i32) {
    %c0_i32 = arith.constant 0 : i32
    %c0_i32_0 = arith.constant 0 : i32
    %c0_i32_1 = arith.constant 0 : i32
    return %c0_i32, %c0_i32_0 : i32, i32
  }
  func.func @transform_5(%arg0: i32) -> (i32, i32) {
    %c0_i32 = arith.constant 0 : i32
    %c0_i32_0 = arith.constant 0 : i32
    %c0_i32_1 = arith.constant 0 : i32
    return %c0_i32, %c0_i32_0 : i32, i32
  }
  func.func @transform_6(%arg0: i32) -> (i32, i32) {
    %c0_i32 = arith.constant 0 : i32
    %c0_i32_0 = arith.constant 0 : i32
    %c0_i32_1 = arith.constant 0 : i32
    return %c0_i32, %c0_i32_0 : i32, i32
  }
  func.func @transform_7(%arg0: i32) -> (i32, i32) {
    %c0_i32 = arith.constant 0 : i32
    %c0_i32_0 = arith.constant 0 : i32
    return %arg0, %c0_i32 : i32, i32
  }
}

</mosaic_0001>

<llo_original>
// kernel: decoder_forward.1
$region0: #{decoder_forward.1}
  #allocation0 [shape = 'u32[]', space=smem, size = 0x4, offset = 0x4, fixed_abs, tag = 'smem constant byte address 0x4 - core index']
  #allocation1 [shape = 'u32[144,128]{1,0:T(1,128)}', space=vmem, size = 0x12000, scoped, tag = 'internal scratch']
  %s0 = inlined_call_operand.hbm [shape: f32[8,32], index: 0, kind: input, shape index: {}]
  %s1 = inlined_call_operand.hbm [shape: bf16[32,256], index: 1, kind: input, shape index: {}]
  %s2 = inlined_call_operand.vmem [shape: f32[1,256], index: 2, kind: input, shape index: {}]
  %s3 = inlined_call_operand.hbm [shape: bf16[256,128], index: 3, kind: input, shape index: {}]
  %s4 = inlined_call_operand.vmem [shape: f32[1,128], index: 4, kind: input, shape index: {}]
  %s5 = inlined_call_operand.hbm [shape: bf16[128,128], index: 5, kind: input, shape index: {}]
  %s6 = inlined_call_operand.vmem [shape: f32[1,128], index: 6, kind: input, shape index: {}]
  %s7 = inlined_call_operand.vmem [shape: f32[8,128], index: 7, kind: output, shape index: {}]
  %s8 = sld [smem:[#allocation0]]
  $region54: #{decoder_forward.1} parent=0
    _
  %s10 = ssub.s32 1, %s8
  %s11 = scalar_select 0, %s10, %s8
  $region1: #{decoder_forward.1} parent=0
    #allocation2 [shape = 'u8[4096]{0}', space=vmem, size = 0x1000, scoped, tag = 'input window, operand 0, single buffered']
    #allocation3 [shape = 's32[1]{0}', space=sflag, size = 0x4, scoped, tag = 'scoped memory for decoder_forward.1']
    #allocation4 [shape = 'u8[16384]{0}', space=vmem, size = 0x4000, scoped, tag = 'input window, operand 1, single buffered']
    #allocation5 [shape = 's32[1]{0}', space=sflag, size = 0x4, scoped, tag = 'scoped memory for decoder_forward.1']
    #allocation6 [shape = 'u8[65536]{0}', space=vmem, size = 0x10000, scoped, tag = 'input window, operand 3, single buffered']
    #allocation7 [shape = 'u8[32768]{0}', space=vmem, size = 0x8000, scoped, tag = 'input window, operand 5, single buffered']
    #allocation8 [shape = 's32[1]{0}', space=sflag, size = 0x4, scoped, tag = 'scoped memory for decoder_forward.1']
    %12 = vsyncpa [#allocation3], 0
    %13 = vsyncpa [#allocation5], 0
    %14 = vsyncpa [#allocation8], 0
    // Predicated region
    $region2: #{decoder_forward.1} parent=1 // pred_check
      _
    $region3: #{decoder_forward.1} parent=1 // pred_check_branch
      %16 = sbr.rel (0) target = $region5
    $region4: #{decoder_forward.1} parent=1 // pred_region
      %s18 = ssub.s32 128, 128
      %19 = vsyncadd [#allocation3], %s18
      %s21 = sshll.u32 [#allocation2], 4
      %s22 = int_to_ptr.vmem [resolvable:$true] %s21
      %24 = dma.hbm_to_vmem [thread:$0]  %s0, 128, %s22, [#allocation3]
    $region5: #{decoder_forward.1} parent=1 // pred_fallthru
      _
    // Predicated region
    $region6: #{decoder_forward.1} parent=1 // pred_check
      _
    $region7: #{decoder_forward.1} parent=1 // pred_check_branch
      %26 = sbr.rel (0) target = $region9
    $region8: #{decoder_forward.1} parent=1 // pred_region
      %s28 = ssub.s32 512, 512
      %29 = vsyncadd [#allocation5], %s28
      %s30 = sshll.u32 [#allocation4], 4
      %s31 = int_to_ptr.vmem [resolvable:$true] %s30
      %36 = dma.hbm_to_vmem [thread:$0]  %s1, 512, %s31, [#allocation5], 128, 128, 8
    $region9: #{decoder_forward.1} parent=1 // pred_fallthru
      _
    // Predicated region
    $region10: #{decoder_forward.1} parent=1 // pred_check
      _
    $region11: #{decoder_forward.1} parent=1 // pred_check_branch
      %38 = sbr.rel (0) target = $region13
    $region12: #{decoder_forward.1} parent=1 // pred_region
      _
    $region13: #{decoder_forward.1} parent=1 // pred_fallthru
      _
    // Predicated region
    $region14: #{decoder_forward.1} parent=1 // pred_check
      _
    $region15: #{decoder_forward.1} parent=1 // pred_check_branch
      %40 = sbr.rel (0) target = $region17
    $region16: #{decoder_forward.1} parent=1 // pred_region
      %s42 = ssub.s32 2048, 2048
      %43 = vsyncadd [#allocation5], %s42
      %s44 = sshll.u32 [#allocation6], 4
      %s45 = int_to_ptr.vmem [resolvable:$true] %s44
      %50 = dma.hbm_to_vmem [thread:$0]  %s3, 2048, %s45, [#allocation5], 64, 64, 4
    $region17: #{decoder_forward.1} parent=1 // pred_fallthru
      _
    // Predicated region
    $region18: #{decoder_forward.1} parent=1 // pred_check
      _
    $region19: #{decoder_forward.1} parent=1 // pred_check_branch
      %52 = sbr.rel (0) target = $region21
    $region20: #{decoder_forward.1} parent=1 // pred_region
      _
    $region21: #{decoder_forward.1} parent=1 // pred_fallthru
      _
    // Predicated region
    $region22: #{decoder_forward.1} parent=1 // pred_check
      _
    $region23: #{decoder_forward.1} parent=1 // pred_check_branch
      %54 = sbr.rel (0) target = $region25
    $region24: #{decoder_forward.1} parent=1 // pred_region
      %s56 = ssub.s32 1024, 1024
      %57 = vsyncadd [#allocation8], %s56
      %s58 = sshll.u32 [#allocation7], 4
      %s59 = int_to_ptr.vmem [resolvable:$true] %s58
      %64 = dma.hbm_to_vmem [thread:$0]  %s5, 1024, %s59, [#allocation8], 64, 64, 4
    $region25: #{decoder_forward.1} parent=1 // pred_fallthru
      _
    // Predicated region
    $region26: #{decoder_forward.1} parent=1 // pred_check
      _
    $region27: #{decoder_forward.1} parent=1 // pred_check_branch
      %66 = sbr.rel (0) target = $region29
    $region28: #{decoder_forward.1} parent=1 // pred_region
      _
    $region29: #{decoder_forward.1} parent=1 // pred_fallthru
      _
    // Predicated region
    $region30: #{decoder_forward.1} parent=1 // pred_check
      _
    $region31: #{decoder_forward.1} parent=1 // pred_check_branch
      %68 = sbr.rel (0) target = $region33
    $region32: #{decoder_forward.1} parent=1 // pred_region
      %69 = dma.done [#allocation3], 128
    $region33: #{decoder_forward.1} parent=1 // pred_fallthru
      _
    // Predicated region
    $region34: #{decoder_forward.1} parent=1 // pred_check
      _
    $region35: #{decoder_forward.1} parent=1 // pred_check_branch
      %71 = sbr.rel (0) target = $region37
    $region36: #{decoder_forward.1} parent=1 // pred_region
      %72 = dma.done [#allocation5], 512
    $region37: #{decoder_forward.1} parent=1 // pred_fallthru
      _
    // Predicated region
    $region38: #{decoder_forward.1} parent=1 // pred_check
      _
    $region39: #{decoder_forward.1} parent=1 // pred_check_branch
      %74 = sbr.rel (0) target = $region41
    $region40: #{decoder_forward.1} parent=1 // pred_region
      %75 = dma.done [#allocation5], 2048
    $region41: #{decoder_forward.1} parent=1 // pred_fallthru
      _
    // Predicated region
    $region42: #{decoder_forward.1} parent=1 // pred_check
      _
    $region43: #{decoder_forward.1} parent=1 // pred_check_branch
      %77 = sbr.rel (0) target = $region45
    $region44: #{decoder_forward.1} parent=1 // pred_region
      %78 = dma.done [#allocation8], 1024
    $region45: #{decoder_forward.1} parent=1 // pred_fallthru
      _
    %v80 = vld [vmem:[#allocation2] sm:$0xff]
    %v81 = vpack.c.bf16 %v80, %v80
    %v82 = vld [vmem:[#allocation4] sm:$0xff]
    %v83 = vld [vmem:[#allocation4 + $0x8] sm:$0xff]
    %v84 = vld [vmem:[#allocation4 + $0x10] sm:$0xff]
    %v85 = vld [vmem:[#allocation4 + $0x18] sm:$0xff]
    %v90 = vunpack.c.l.b16 %v82
    %v91 = vunpack.c.h.b16 %v82
    %v92 = vunpack.c.l.b16 %v83
    %v93 = vunpack.c.h.b16 %v83
    %v94 = vunpack.c.l.b16 %v84
    %v95 = vunpack.c.h.b16 %v84
    %v96 = vunpack.c.l.b16 %v85
    %v97 = vunpack.c.h.b16 %v85
    %v98 = vpack.c.b16 %v92, %v90
    %v99 = vpack.c.b16 %v93, %v91
    %v100 = vpack.c.b16 %v96, %v94
    %v101 = vpack.c.b16 %v97, %v95
    %vm106 = vcmask 261120
    %v108 = vsel %vm106, %v81, 0
    %110 = vmatprep.subr.bf16.mxu0 %v99
    %111 = vmatpush1.bf16.msra.mxu0 %v98
    %112 = vmatprep.subr.bf16.mxu0 %v101
    %113 = vmatpush1.bf16.msra.mxu0 %v100
    %114 = vmatprep.subr.bf16.mxu0 0
    %115 = vmatpush1.bf16.msra.mxu0 0
    %116 = vmatprep.subr.bf16.mxu0 0
    %117 = vmatpush1.bf16.msra.mxu0 0
    %118 = vmatprep.subr.bf16.mxu0 0
    %119 = vmatpush1.bf16.msra.mxu0 0
    %120 = vmatprep.subr.bf16.mxu0 0
    %121 = vmatpush1.bf16.msra.mxu0 0
    %122 = vmatprep.subr.bf16.mxu0 0
    %123 = vmatpush1.bf16.msra.mxu0 0
    %124 = vmatprep.subr.bf16.mxu0 0
    %125 = vmatpush1.bf16.msra.mxu0 0
    %126 = vmatprep.subr.bf16.mxu0 0
    %127 = vmatpush1.bf16.msra.mxu0 0
    %128 = vmatprep.subr.bf16.mxu0 0
    %129 = vmatpush1.bf16.msra.mxu0 0
    %130 = vmatprep.subr.bf16.mxu0 0
    %131 = vmatpush1.bf16.msra.mxu0 0
    %132 = vmatprep.subr.bf16.mxu0 0
    %133 = vmatpush1.bf16.msra.mxu0 0
    %134 = vmatprep.subr.bf16.mxu0 0
    %135 = vmatpush1.bf16.msra.mxu0 0
    %136 = vmatprep.subr.bf16.mxu0 0
    %137 = vmatpush1.bf16.msra.mxu0 0
    %138 = vmatprep.subr.bf16.mxu0 0
    %139 = vmatpush1.bf16.msra.mxu0 0
    %140 = vmatprep.subr.bf16.mxu0 0
    %141 = vmatpush1.bf16.msra.mxu0 0
    %142 = vmatprep.mubr.bf16.mxu0 0
    %143 = vmatmul.mubr.bf16.gmra.mrb[0].mxu0 %v108
    %v144 = vpop.f32.mrb[0].mxu0
    %v145 = vadd.f32 0.0, %v144
    %v146 = vpop.f32.mrb[0].mxu0
    %v147 = vadd.f32 0.0, %v146
    %v148 = vpop.f32.mrb[0].mxu0
    %v149 = vpop.f32.mrb[0].mxu0
    %150 = vdwg.mxu0
    %v151 = vpack.c.bf16 %v145, %v145
    %v152 = vpack.c.bf16 %v147, %v147
    %v153 = vld [vmem:[%s2] sm:$0x3]
    %v155 = vlaneseq
    %v156 = vshrl.u32 %v155, 7
    %v157 = vsub.s32 0, %v156
    %v158 = vrot.slane %v153, %v157
    %v159 = vlaneseq
    %v160 = vshrl.u32 %v159, 7
    %v161 = vsub.s32 1, %v160
    %v162 = vrot.slane %v153, %v161
    %v165 = vpack.c.bf16 %v158, %v158
    %v166 = vpack.c.bf16 %v162, %v162
    %v168 = vpack.i.b16 %v165, %v165
    %v170 = vlaneseq
    %v171 = vshrl.u32 %v170, 7
    %v172 = vsub.s32 0, %v171
    %v173 = vrot.slane %v168, %v172
    %v175 = vpack.i.b16 %v166, %v166
    %v177 = vlaneseq
    %v178 = vshrl.u32 %v177, 7
    %v179 = vsub.s32 0, %v178
    %v180 = vrot.slane %v175, %v179
    %v181 = vadd.bf16 %v151, %v173
    %v182 = vadd.bf16 %v152, %v180
    %v183 = vtanh.bf16.pop %v181
    %v184 = vtanh.bf16.pop %v182
    %v185 = vld [vmem:[#allocation6] sm:$0xf]
    %v186 = vld [vmem:[#allocation6 + $0x4] sm:$0xf]
    %v187 = vld [vmem:[#allocation6 + $0x8] sm:$0xf]
    %v188 = vld [vmem:[#allocation6 + $0xc] sm:$0xf]
    %v189 = vld [vmem:[#allocation6 + $0x10] sm:$0xf]
    %v190 = vld [vmem:[#allocation6 + $0x14] sm:$0xf]
    %v191 = vld [vmem:[#allocation6 + $0x18] sm:$0xf]
    %v192 = vld [vmem:[#allocation6 + $0x1c] sm:$0xf]
    %v193 = vld [vmem:[#allocation6 + $0x20] sm:$0xf]
    %v194 = vld [vmem:[#allocation6 + $0x24] sm:$0xf]
    %v195 = vld [vmem:[#allocation6 + $0x28] sm:$0xf]
    %v196 = vld [vmem:[#allocation6 + $0x2c] sm:$0xf]
    %v197 = vld [vmem:[#allocation6 + $0x30] sm:$0xf]
    %v198 = vld [vmem:[#allocation6 + $0x34] sm:$0xf]
    %v199 = vld [vmem:[#allocation6 + $0x38] sm:$0xf]
    %v200 = vld [vmem:[#allocation6 + $0x3c] sm:$0xf]
    %v201 = vld [vmem:[#allocation6 + $0x40] sm:$0xf]
    %v202 = vld [vmem:[#allocation6 + $0x44] sm:$0xf]
    %v203 = vld [vmem:[#allocation6 + $0x48] sm:$0xf]
    %v204 = vld [vmem:[#allocation6 + $0x4c] sm:$0xf]
    %v205 = vld [vmem:[#allocation6 + $0x50] sm:$0xf]
    %v206 = vld [vmem:[#allocation6 + $0x54] sm:$0xf]
    %v207 = vld [vmem:[#allocation6 + $0x58] sm:$0xf]
    %v208 = vld [vmem:[#allocation6 + $0x5c] sm:$0xf]
    %v209 = vld [vmem:[#allocation6 + $0x60] sm:$0xf]
    %v210 = vld [vmem:[#allocation6 + $0x64] sm:$0xf]
    %v211 = vld [vmem:[#allocation6 + $0x68] sm:$0xf]
    %v212 = vld [vmem:[#allocation6 + $0x6c] sm:$0xf]
    %v213 = vld [vmem:[#allocation6 + $0x70] sm:$0xf]
    %v214 = vld [vmem:[#allocation6 + $0x74] sm:$0xf]
    %v215 = vld [vmem:[#allocation6 + $0x78] sm:$0xf]
    %v216 = vld [vmem:[#allocation6 + $0x7c] sm:$0xf]
    %v249 = vunpack.c.l.b16 %v185
    %v250 = vunpack.c.l.b16 %v186
    %v251 = vunpack.c.l.b16 %v187
    %v252 = vunpack.c.l.b16 %v188
    %v253 = vunpack.c.l.b16 %v189
    %v254 = vunpack.c.l.b16 %v190
    %v255 = vunpack.c.l.b16 %v191
    %v256 = vunpack.c.l.b16 %v192
    %v257 = vunpack.c.l.b16 %v193
    %v258 = vunpack.c.l.b16 %v194
    %v259 = vunpack.c.l.b16 %v195
    %v260 = vunpack.c.l.b16 %v196
    %v261 = vunpack.c.l.b16 %v197
    %v262 = vunpack.c.l.b16 %v198
    %v263 = vunpack.c.l.b16 %v199
    %v264 = vunpack.c.l.b16 %v200
    %v265 = vunpack.c.l.b16 %v201
    %v266 = vunpack.c.l.b16 %v202
    %v267 = vunpack.c.l.b16 %v203
    %v268 = vunpack.c.l.b16 %v204
    %v269 = vunpack.c.l.b16 %v205
    %v270 = vunpack.c.l.b16 %v206
    %v271 = vunpack.c.l.b16 %v207
    %v272 = vunpack.c.l.b16 %v208
    %v273 = vunpack.c.l.b16 %v209
    %v274 = vunpack.c.l.b16 %v210
    %v275 = vunpack.c.l.b16 %v211
    %v276 = vunpack.c.l.b16 %v212
    %v277 = vunpack.c.l.b16 %v213
    %v278 = vunpack.c.l.b16 %v214
    %v279 = vunpack.c.l.b16 %v215
    %v280 = vunpack.c.l.b16 %v216
    %v281 = vpack.c.b16 %v250, %v249
    %v282 = vpack.c.b16 %v252, %v251
    %v283 = vpack.c.b16 %v254, %v253
    %v284 = vpack.c.b16 %v256, %v255
    %v285 = vpack.c.b16 %v258, %v257
    %v286 = vpack.c.b16 %v260, %v259
    %v287 = vpack.c.b16 %v262, %v261
    %v288 = vpack.c.b16 %v264, %v263
    %v289 = vpack.c.b16 %v266, %v265
    %v290 = vpack.c.b16 %v268, %v267
    %v291 = vpack.c.b16 %v270, %v269
    %v292 = vpack.c.b16 %v272, %v271
    %v293 = vpack.c.b16 %v274, %v273
    %v294 = vpack.c.b16 %v276, %v275
    %v295 = vpack.c.b16 %v278, %v277
    %v296 = vpack.c.b16 %v280, %v279
    %313 = vmatprep.subr.bf16.mxu0 0
    %314 = vmatpush1.bf16.msra.mxu0 %v281
    %315 = vmatprep.subr.bf16.mxu0 0
    %316 = vmatpush1.bf16.msra.mxu0 %v282
    %317 = vmatprep.subr.bf16.mxu0 0
    %318 = vmatpush1.bf16.msra.mxu0 %v283
    %319 = vmatprep.subr.bf16.mxu0 0
    %320 = vmatpush1.bf16.msra.mxu0 %v284
    %321 = vmatprep.subr.bf16.mxu0 0
    %322 = vmatpush1.bf16.msra.mxu0 %v285
    %323 = vmatprep.subr.bf16.mxu0 0
    %324 = vmatpush1.bf16.msra.mxu0 %v286
    %325 = vmatprep.subr.bf16.mxu0 0
    %326 = vmatpush1.bf16.msra.mxu0 %v287
    %327 = vmatprep.subr.bf16.mxu0 0
    %328 = vmatpush1.bf16.msra.mxu0 %v288
    %329 = vmatprep.subr.bf16.mxu0 0
    %330 = vmatpush1.bf16.msra.mxu0 %v289
    %331 = vmatprep.subr.bf16.mxu0 0
    %332 = vmatpush1.bf16.msra.mxu0 %v290
    %333 = vmatprep.subr.bf16.mxu0 0
    %334 = vmatpush1.bf16.msra.mxu0 %v291
    %335 = vmatprep.subr.bf16.mxu0 0
    %336 = vmatpush1.bf16.msra.mxu0 %v292
    %337 = vmatprep.subr.bf16.mxu0 0
    %338 = vmatpush1.bf16.msra.mxu0 %v293
    %339 = vmatprep.subr.bf16.mxu0 0
    %340 = vmatpush1.bf16.msra.mxu0 %v294
    %341 = vmatprep.subr.bf16.mxu0 0
    %342 = vmatpush1.bf16.msra.mxu0 %v295
    %343 = vmatprep.subr.bf16.mxu0 0
    %344 = vmatpush1.bf16.msra.mxu0 %v296
    %345 = vmatprep.mubr.bf16.mxu0 %v184
    %346 = vmatmul.mubr.bf16.gmra.mrb[0].mxu0 %v183
    %v347 = vpop.f32.mrb[0].mxu0
    %v348 = vadd.f32 0.0, %v347
    %v349 = vpop.f32.mrb[0].mxu0
    %v350 = vpop.f32.mrb[0].mxu0
    %v351 = vpop.f32.mrb[0].mxu0
    %352 = vdwg.mxu0
    %v353 = vpack.c.bf16 %v348, %v348
    %v354 = vld [vmem:[%s4] sm:$0x1]
    %v355 = vpack.c.bf16 %v354, %v354
    %v357 = vpack.i.b16 %v355, %v355
    %v359 = vlaneseq
    %v360 = vshrl.u32 %v359, 7
    %v361 = vsub.s32 0, %v360
    %v362 = vrot.slane %v357, %v361
    %v363 = vadd.bf16 %v353, %v362
    %v364 = vtanh.bf16.pop %v363
    %v365 = vld [vmem:[#allocation7] sm:$0xf]
    %v366 = vld [vmem:[#allocation7 + $0x4] sm:$0xf]
    %v367 = vld [vmem:[#allocation7 + $0x8] sm:$0xf]
    %v368 = vld [vmem:[#allocation7 + $0xc] sm:$0xf]
    %v369 = vld [vmem:[#allocation7 + $0x10] sm:$0xf]
    %v370 = vld [vmem:[#allocation7 + $0x14] sm:$0xf]
    %v371 = vld [vmem:[#allocation7 + $0x18] sm:$0xf]
    %v372 = vld [vmem:[#allocation7 + $0x1c] sm:$0xf]
    %v373 = vld [vmem:[#allocation7 + $0x20] sm:$0xf]
    %v374 = vld [vmem:[#allocation7 + $0x24] sm:$0xf]
    %v375 = vld [vmem:[#allocation7 + $0x28] sm:$0xf]
    %v376 = vld [vmem:[#allocation7 + $0x2c] sm:$0xf]
    %v377 = vld [vmem:[#allocation7 + $0x30] sm:$0xf]
    %v378 = vld [vmem:[#allocation7 + $0x34] sm:$0xf]
    %v379 = vld [vmem:[#allocation7 + $0x38] sm:$0xf]
    %v380 = vld [vmem:[#allocation7 + $0x3c] sm:$0xf]
    %v381 = vld [vmem:[%s6] sm:$0x1]
    %v383 = vlaneseq
    %v384 = vshrl.u32 %v383, 7
    %v385 = vsub.s32 0, %v384
    %v386 = vrot.slane %v381, %v385
    %v404 = vunpack.c.l.b16 %v365
    %v405 = vunpack.c.l.b16 %v366
    %v406 = vunpack.c.l.b16 %v367
    %v407 = vunpack.c.l.b16 %v368
    %v408 = vunpack.c.l.b16 %v369
    %v409 = vunpack.c.l.b16 %v370
    %v410 = vunpack.c.l.b16 %v371
    %v411 = vunpack.c.l.b16 %v372
    %v412 = vunpack.c.l.b16 %v373
    %v413 = vunpack.c.l.b16 %v374
    %v414 = vunpack.c.l.b16 %v375
    %v415 = vunpack.c.l.b16 %v376
    %v416 = vunpack.c.l.b16 %v377
    %v417 = vunpack.c.l.b16 %v378
    %v418 = vunpack.c.l.b16 %v379
    %v419 = vunpack.c.l.b16 %v380
    %v420 = vpack.c.b16 %v405, %v404
    %v421 = vpack.c.b16 %v407, %v406
    %v422 = vpack.c.b16 %v409, %v408
    %v423 = vpack.c.b16 %v411, %v410
    %v424 = vpack.c.b16 %v413, %v412
    %v425 = vpack.c.b16 %v415, %v414
    %v426 = vpack.c.b16 %v417, %v416
    %v427 = vpack.c.b16 %v419, %v418
    %436 = vmatprep.subr.bf16.mxu0 0
    %437 = vmatpush1.bf16.msra.mxu0 %v420
    %438 = vmatprep.subr.bf16.mxu0 0
    %439 = vmatpush1.bf16.msra.mxu0 %v421
    %440 = vmatprep.subr.bf16.mxu0 0
    %441 = vmatpush1.bf16.msra.mxu0 %v422
    %442 = vmatprep.subr.bf16.mxu0 0
    %443 = vmatpush1.bf16.msra.mxu0 %v423
    %444 = vmatprep.subr.bf16.mxu0 0
    %445 = vmatpush1.bf16.msra.mxu0 %v424
    %446 = vmatprep.subr.bf16.mxu0 0
    %447 = vmatpush1.bf16.msra.mxu0 %v425
    %448 = vmatprep.subr.bf16.mxu0 0
    %449 = vmatpush1.bf16.msra.mxu0 %v426
    %450 = vmatprep.subr.bf16.mxu0 0
    %451 = vmatpush1.bf16.msra.mxu0 %v427
    %452 = vmatprep.subr.bf16.mxu0 0
    %453 = vmatpush1.bf16.msra.mxu0 0
    %454 = vmatprep.subr.bf16.mxu0 0
    %455 = vmatpush1.bf16.msra.mxu0 0
    %456 = vmatprep.subr.bf16.mxu0 0
    %457 = vmatpush1.bf16.msra.mxu0 0
    %458 = vmatprep.subr.bf16.mxu0 0
    %459 = vmatpush1.bf16.msra.mxu0 0
    %460 = vmatprep.subr.bf16.mxu0 0
    %461 = vmatpush1.bf16.msra.mxu0 0
    %462 = vmatprep.subr.bf16.mxu0 0
    %463 = vmatpush1.bf16.msra.mxu0 0
    %464 = vmatprep.subr.bf16.mxu0 0
    %465 = vmatpush1.bf16.msra.mxu0 0
    %466 = vmatprep.subr.bf16.mxu0 0
    %467 = vmatpush1.bf16.msra.mxu0 0
    %468 = vmatprep.mubr.bf16.mxu0 0
    %469 = vmatmul.mubr.bf16.gmra.mrb[0].mxu0 %v364
    %v470 = vpop.f32.mrb[0].mxu0
    %v471 = vadd.f32 %v386, %v470
    %v472 = vpop.f32.mrb[0].mxu0
    %v473 = vpop.f32.mrb[0].mxu0
    %v474 = vpop.f32.mrb[0].mxu0
    %475 = vdwg.mxu0
    %476 = vst [vmem:[%s7] sm:$0xff] %v471
    // Predicated region
    $region46: #{decoder_forward.1} parent=1 // pred_check
      _
    $region47: #{decoder_forward.1} parent=1 // pred_check_branch
      %478 = sbr.rel (0) target = $region49
    $region48: #{decoder_forward.1} parent=1 // pred_region
      _
    $region49: #{decoder_forward.1} parent=1 // pred_fallthru
      _
    // Predicated region
    $region50: #{decoder_forward.1} parent=1 // pred_check
      _
    $region51: #{decoder_forward.1} parent=1 // pred_check_branch
      %480 = sbr.rel (0) target = $region53
    $region52: #{decoder_forward.1} parent=1 // pred_region
      _
    $region53: #{decoder_forward.1} parent=1 // pred_fallthru
      _
    %481 = vsyncpa [#allocation3], 1
    %482 = vsyncpa [#allocation5], 1
    %483 = vsyncpa [#allocation8], 1

</llo_original>
